<compile_context>
chip_gen: v5e
topology: v5e:2x2
jax: 0.10.0
libtpu: 0.0.40
codegen_flags: <defaults>
</compile_context>

<pallas_src>
import math

import jax
import jax.numpy as jnp
from jax.experimental import pallas as pl
from jax.experimental.pallas import tpu as pltpu

# ----- model hyper-parameters (small, consistent with the module) -----
EMBED = 32
HEADS = 4
HEAD_DIM = EMBED // HEADS
FWD_EXP = 2
FFN = FWD_EXP * EMBED
NUM_LAYERS = 2
MAX_LEN = 16       # max_length -> input feature dim of nn.Linear(max_length, embed_size)
SEQ = 8
BATCH = 2
NS = BATCH * SEQ   # flattened (batch*seq) rows fed to the MXU
LANES = 128        # lane width of the single parameter slab


# ---------------- parameter-slab layout (static, sublane-aligned offsets) ----------------
def _build_layout():
    slots = {}
    off = 0

    def add(name, rows, cols):
        nonlocal off
        if rows >= 8:
            off += (-off) % 8          # sublane-align every matrix slice (offset % 8 == 0)
        slots[name] = (off, rows, cols)
        off += rows

    add("emb_wT", MAX_LEN, EMBED)              # embedding weight, pre-transposed
    add("posb", NS, EMBED)                     # batch-tiled pos encoding + embedding bias
    add("maskb", NS, HEADS * NS)               # additive attention bias (0 / -1e20), head-tiled
    add("stackmask", HEADS * NS, EMBED)        # per-head lane masks for the stacked K/V
    add("segsum", HEADS * NS, HEADS * NS)      # block-of-ones matrix for per-head softmax sums
    for li in range(NUM_LAYERS):
        p = f"l{li}_"
        add(p + "wqkvT", EMBED, 3 * EMBED)     # fused block-diag Q|K|V weight (scale folded in Q)
        add(p + "woT", EMBED, EMBED)
        add(p + "w1T", EMBED, FFN)
        add(p + "w2T", FFN, EMBED)
        for bname, cols in (("bo", EMBED), ("g1", EMBED), ("be1", EMBED),
                            ("bf1", FFN), ("bf2", EMBED), ("g2", EMBED), ("be2", EMBED)):
            add(p + bname, 1, cols)
    rows = off + ((-off) % 8)
    return slots, rows


SLOT, ROWS = _build_layout()


# ---------------- the fused encoder kernel ----------------
def encoder_kernel(x_ref, slab_ref, out_ref):
    """x_ref: (N*S, L) f32; slab_ref: (ROWS, 128) f32 parameter slab; out_ref: (N*S, E)."""

    def p(name):
        off, rows, cols = SLOT[name]
        return slab_ref[off:off + rows, 0:cols]

    def layer_norm(v, gamma, beta):
        mu = jnp.mean(v, axis=-1, keepdims=True)
        var = jnp.mean((v - mu) ** 2, axis=-1, keepdims=True)
        return (v - mu) * jax.lax.rsqrt(var + 1e-5) * gamma + beta

    x = x_ref[...]                               # (NS, L)
    mask_bias = p("maskb")                       # (NS, H*NS) additive 0 / -1e20, hoisted once
    smask = p("stackmask")                       # (H*NS, E)  0/1 per-head lane masks
    segsum = p("segsum")                         # (H*NS, H*NS) block-of-ones

    # embedding: x @ W_emb.T + (bias + batch-tiled pos), folded host-side into posb
    h = jnp.dot(x, p("emb_wT"), preferred_element_type=jnp.float32) + p("posb")

    for li in range(NUM_LAYERS):                 # static unroll: all params already VMEM-resident
        pfx = f"l{li}_"
        # fused Q|K|V projection: one (NS,E)@(E,3E) matmul; 1/sqrt(E) folded into the Q columns
        qkv = jnp.dot(h, p(pfx + "wqkvT"), preferred_element_type=jnp.float32)   # (NS, 3E)
        q = qkv[:, 0:EMBED]
        k = qkv[:, EMBED:2 * EMBED]
        v = qkv[:, 2 * EMBED:3 * EMBED]

        # stack per-head lane-masked K / V along sublanes -> (H*NS, E); columns of the energy
        # matrix are then ordered head-major: c = head * NS + key_row
        k_stack = jnp.concatenate([k] * HEADS, axis=0) * smask
        v_stack = jnp.concatenate([v] * HEADS, axis=0) * smask

        energy = jax.lax.dot_general(q, k_stack, (((1,), (1,)), ((), ())),
                                     preferred_element_type=jnp.float32)         # (NS, H*NS)
        energy = energy + mask_bias              # masked entries -> ~-1e20, exp() underflows to 0
        e_max = jnp.max(energy, axis=-1, keepdims=True)   # global row max: softmax is
        p_un = jnp.exp(energy - e_max)                    # shift-invariant within each head segment
        denom = jnp.dot(p_un, segsum, preferred_element_type=jnp.float32)        # per-head sums
        att = p_un / denom                                 # exact divide (tiny tensor)
        ctx = jnp.dot(att, v_stack, preferred_element_type=jnp.float32)          # (NS, E)

        attn = jnp.dot(ctx, p(pfx + "woT"),
                       preferred_element_type=jnp.float32) + p(pfx + "bo")
        x1 = layer_norm(attn + h, p(pfx + "g1"), p(pfx + "be1"))
        h1 = jnp.maximum(
            jnp.dot(x1, p(pfx + "w1T"), preferred_element_type=jnp.float32)
            + p(pfx + "bf1"), 0.0)
        ff = jnp.dot(h1, p(pfx + "w2T"),
                     preferred_element_type=jnp.float32) + p(pfx + "bf2")
        h = layer_norm(ff + x1, p(pfx + "g2"), p(pfx + "be2"))

    out_ref[...] = h


# ---------------- host-side packing (done once, outside the hot path) ----------------
def build_mask_bias(mask_ss, n, s):
    """(S,S) mask (1 == masked) -> (N*S, HEADS*N*S) f32 additive bias with cross-batch
    entries masked (so flattened attention never mixes batch elements), tiled per head."""
    mask = jnp.broadcast_to(mask_ss, (n, s, s))
    same = (jnp.eye(n, dtype=jnp.int32) == 1)[:, None, :, None]        # (n,1,n,1)
    masked = jnp.where(same, mask[:, :, None, :] == 1, True)           # (n,s,n,s) True == masked
    bias = jnp.where(masked.reshape(n * s, n * s), jnp.float32(-1e20), jnp.float32(0.0))
    return jnp.tile(bias, (1, HEADS))                                  # (NS, HEADS*NS)


def pack_params(params, pos, mask_ss):
    """Pre-transpose, block-diagonalize, fold constants and the attention-mask bias, and pack
    every parameter into a single lane-dense (ROWS, 128) f32 slab matching SLOT."""
    eye_h = jnp.eye(HEADS, dtype=jnp.float32)
    scale = 1.0 / math.sqrt(EMBED)

    def blockdiag_t(w):                          # (d,d) torch-layout weight -> kron(I_H, w.T)
        return jnp.kron(eye_h, w.T)

    hmask = jnp.repeat(eye_h, HEAD_DIM, axis=1)                        # (H, E)
    pieces = {
        "emb_wT": params["emb_w"].T,                                   # (L, E)
        "posb": jnp.tile(pos, (BATCH, 1)) + params["emb_b"],           # (N*S, E)
        "maskb": build_mask_bias(mask_ss, BATCH, SEQ),                 # (N*S, H*N*S)
        "stackmask": jnp.repeat(hmask, NS, axis=0),                    # (H*N*S, E)
        "segsum": jnp.kron(eye_h, jnp.ones((NS, NS), jnp.float32)),    # (H*N*S, H*N*S)
    }
    for li, lp in enumerate(params["layers"]):
        pfx = f"l{li}_"
        pieces[pfx + "wqkvT"] = jnp.concatenate(
            [blockdiag_t(lp["wq"]) * scale,       # fold 1/sqrt(E) into the Q projection
             blockdiag_t(lp["wk"]),
             blockdiag_t(lp["wv"])], axis=1)      # (E, 3E)
        pieces[pfx + "woT"] = lp["wo"].T
        pieces[pfx + "w1T"] = lp["w1"].T
        pieces[pfx + "w2T"] = lp["w2"].T
        for bname in ("bo", "g1", "be1", "bf1", "bf2", "g2", "be2"):
            pieces[pfx + bname] = lp[bname]

    slab = jnp.zeros((ROWS, LANES), dtype=jnp.float32)
    for name, piece in pieces.items():
        off, rows, cols = SLOT[name]
        piece = jnp.asarray(piece, dtype=jnp.float32).reshape(rows, cols)
        slab = slab.at[off:off + rows, 0:cols].set(piece)
    return slab


def encoder_forward(x, slab):
    """x: (N,S,L) f32; slab: (ROWS,128) f32 from pack_params. Returns (N,S,E)."""
    n, s, l = x.shape
    xf = x.reshape(n * s, l)
    vmem = pl.BlockSpec(memory_space=pltpu.MemorySpace.VMEM)
    out = pl.pallas_call(
        encoder_kernel,
        out_shape=jax.ShapeDtypeStruct((n * s, EMBED), jnp.float32),
        in_specs=[vmem, vmem],
        out_specs=vmem,
    )(xf, slab)
    return out.reshape(n, s, EMBED)


# ---------------- deterministic parameter construction ----------------
def make_params(key):
    def nrm(k, shape, scale=0.1):
        return (scale * jax.random.normal(k, shape)).astype(jnp.float32)

    keys = jax.random.split(key, 2 + NUM_LAYERS)
    params = {
        "emb_w": nrm(keys[0], (EMBED, MAX_LEN)),
        "emb_b": nrm(keys[1], (1, EMBED)),
        "layers": [],
    }
    for li in range(NUM_LAYERS):
        ks = jax.random.split(keys[2 + li], 16)
        lp = {
            "wq": nrm(ks[0], (HEAD_DIM, HEAD_DIM)),
            "wk": nrm(ks[1], (HEAD_DIM, HEAD_DIM)),
            "wv": nrm(ks[2], (HEAD_DIM, HEAD_DIM)),
            "wo": nrm(ks[3], (EMBED, EMBED)),
            "bo": nrm(ks[4], (1, EMBED)),
            "g1": (1.0 + nrm(ks[5], (1, EMBED))),
            "be1": nrm(ks[6], (1, EMBED)),
            "w1": nrm(ks[7], (FFN, EMBED)),
            "bf1": nrm(ks[8], (1, FFN)),
            "w2": nrm(ks[9], (EMBED, FFN)),
            "bf2": nrm(ks[10], (1, EMBED)),
            "g2": (1.0 + nrm(ks[11], (1, EMBED))),
            "be2": nrm(ks[12], (1, EMBED)),
        }
        params["layers"].append(lp)
    return params


# ---------------- pure-JAX reference (mirrors the PyTorch forward) ----------------
def reference_forward(x, pos, mask, params):
    out = x @ params["emb_w"].T + params["emb_b"] + pos
    for p in params["layers"]:
        q = out
        n, s, e = q.shape
        xh = q.reshape(n, s, HEADS, HEAD_DIM)
        qh = xh @ p["wq"].T
        kh = xh @ p["wk"].T
        vh = xh @ p["wv"].T
        energy = jnp.einsum("nqhd,nkhd->nhqk", qh, kh)
        energy = jnp.where(mask[:, None, :, :] == 1, jnp.float32(-1e20), energy)
        att = jax.nn.softmax(energy / math.sqrt(e), axis=3)
        o = jnp.einsum("nhql,nlhd->nqhd", att, vh).reshape(n, s, e)
        o = o @ p["wo"].T + p["bo"]

        def ln(v, g, b):
            mu = v.mean(-1, keepdims=True)
            var = ((v - mu) ** 2).mean(-1, keepdims=True)
            return (v - mu) / jnp.sqrt(var + 1e-5) * g + b

        x1 = ln(o + q, p["g1"], p["be1"])
        ff = jnp.maximum(x1 @ p["w1"].T + p["bf1"], 0.0) @ p["w2"].T + p["bf2"]
        out = ln(ff + x1, p["g2"], p["be2"])
    return out


if __name__ == "__main__":
    key = jax.random.PRNGKey(0)
    k_x, k_pos, k_par = jax.random.split(key, 3)

    x = jax.random.normal(k_x, (BATCH, SEQ, MAX_LEN), dtype=jnp.float32)
    pos = 0.1 * jax.random.normal(k_pos, (SEQ, EMBED), dtype=jnp.float32)
    # causal-style mask shared across the batch: 1 above the diagonal => masked (-1e20)
    mask_ss = jnp.triu(jnp.ones((SEQ, SEQ), dtype=jnp.int32), k=1)
    params = make_params(k_par)

    # one-time host-side packing: fused/pre-transposed/block-diagonal weights, folded pos+bias,
    # the head-tiled additive mask bias, per-head stack masks and the segment-sum matrix
    slab = pack_params(params, pos, mask_ss)

    out = encoder_forward(x, slab)
    out = jax.block_until_ready(out)

    ref = reference_forward(x, pos, jnp.broadcast_to(mask_ss, (BATCH, SEQ, SEQ)), params)
    assert out.shape == (BATCH, SEQ, EMBED)
    # exact softmax divide + f32 matmuls everywhere -> tight tolerance vs the f32 reference
    assert jnp.allclose(out, ref, atol=1e-3, rtol=1e-3), "mismatch vs JAX reference"

    print("KERNEL_OK")
</pallas_src>

<mosaic_0001>
module attributes {stable_mosaic.version = 11 : i64} {
  func.func @encoder_kernel(%arg0: memref<16x16xf32, #tpu.memory_space<vmem>>, %arg1: memref<512x128xf32, #tpu.memory_space<vmem>>, %arg2: memref<16x32xf32, #tpu.memory_space<vmem>>) attributes {dimension_semantics = [], scalar_prefetch = 0 : i64, scratch_operands = 0 : i64, tpu.core_type = #tpu.core_type<tc>} {
    %c0 = arith.constant 0 : index
    %c0_0 = arith.constant 0 : index
    %0 = vector.load %arg0[%c0, %c0_0] : memref<16x16xf32, #tpu.memory_space<vmem>>, vector<16x16xf32>
    %c32 = arith.constant 32 : index
    %c0_1 = arith.constant 0 : index
    %1 = vector.load %arg1[%c32, %c0_1] : memref<512x128xf32, #tpu.memory_space<vmem>>, vector<16x64xf32>
    %c48 = arith.constant 48 : index
    %c0_2 = arith.constant 0 : index
    %2 = vector.load %arg1[%c48, %c0_2] : memref<512x128xf32, #tpu.memory_space<vmem>>, vector<64x32xf32>
    %c112 = arith.constant 112 : index
    %c0_3 = arith.constant 0 : index
    %3 = vector.load %arg1[%c112, %c0_3] : memref<512x128xf32, #tpu.memory_space<vmem>>, vector<64x64xf32>
    %c0_4 = arith.constant 0 : index
    %c0_5 = arith.constant 0 : index
    %4 = vector.load %arg1[%c0_4, %c0_5] : memref<512x128xf32, #tpu.memory_space<vmem>>, vector<16x32xf32>
    %cst = arith.constant dense<0.000000e+00> : vector<16x32xf32>
    %5 = tpu.matmul %0, %4, %cst {dimension_numbers = #tpu.dot_dimension_numbers<[1], [0], [0], [1], [0, 0, 1, 1], [], []>} : vector<16x16xf32>, vector<16x32xf32>, vector<16x32xf32> -> vector<16x32xf32>
    %c16 = arith.constant 16 : index
    %c0_6 = arith.constant 0 : index
    %6 = vector.load %arg1[%c16, %c0_6] : memref<512x128xf32, #tpu.memory_space<vmem>>, vector<16x32xf32>
    %7 = arith.addf %5, %6 : vector<16x32xf32>
    %c176 = arith.constant 176 : index
    %c0_7 = arith.constant 0 : index
    %8 = vector.load %arg1[%c176, %c0_7] : memref<512x128xf32, #tpu.memory_space<vmem>>, vector<32x96xf32>
    %cst_8 = arith.constant dense<0.000000e+00> : vector<16x96xf32>
    %9 = tpu.matmul %7, %8, %cst_8 {dimension_numbers = #tpu.dot_dimension_numbers<[1], [0], [0], [1], [0, 0, 1, 1], [], []>} : vector<16x32xf32>, vector<32x96xf32>, vector<16x96xf32> -> vector<16x96xf32>
    %10 = vector.extract_strided_slice %9 {offsets = [0, 0], sizes = [16, 32], strides = [1, 1]} : vector<16x96xf32> to vector<16x32xf32>
    %11 = vector.extract_strided_slice %9 {offsets = [0, 32], sizes = [16, 32], strides = [1, 1]} : vector<16x96xf32> to vector<16x32xf32>
    %12 = vector.extract_strided_slice %9 {offsets = [0, 64], sizes = [16, 32], strides = [1, 1]} : vector<16x96xf32> to vector<16x32xf32>
    %13 = tpu.concatenate %11, %11, %11, %11 in 0 : vector<16x32xf32>, vector<16x32xf32>, vector<16x32xf32>, vector<16x32xf32> -> vector<64x32xf32>
    %14 = arith.mulf %13, %2 : vector<64x32xf32>
    %15 = tpu.concatenate %12, %12, %12, %12 in 0 : vector<16x32xf32>, vector<16x32xf32>, vector<16x32xf32>, vector<16x32xf32> -> vector<64x32xf32>
    %16 = arith.mulf %15, %2 : vector<64x32xf32>
    %cst_9 = arith.constant dense<0.000000e+00> : vector<16x64xf32>
    %17 = tpu.matmul %10, %14, %cst_9 {dimension_numbers = #tpu.dot_dimension_numbers<[1], [1], [0], [0], [0, 0, 1, 0], [], []>} : vector<16x32xf32>, vector<64x32xf32>, vector<16x64xf32> -> vector<16x64xf32>
    %18 = arith.addf %17, %1 : vector<16x64xf32>
    %cst_10 = arith.constant dense<0xFF800000> : vector<16xf32>
    %19 = vector.multi_reduction <maximumf>, %18, %cst_10 [1] : vector<16x64xf32> to vector<16xf32>
    %20 = vector.shape_cast %19 : vector<16xf32> to vector<16x1xf32>
    %21 = vector.broadcast %20 : vector<16x1xf32> to vector<16x64xf32>
    %22 = arith.subf %18, %21 : vector<16x64xf32>
    %23 = math.exp %22 : vector<16x64xf32>
    %cst_11 = arith.constant dense<0.000000e+00> : vector<16x64xf32>
    %24 = tpu.matmul %23, %3, %cst_11 {dimension_numbers = #tpu.dot_dimension_numbers<[1], [0], [0], [1], [0, 0, 1, 1], [], []>} : vector<16x64xf32>, vector<64x64xf32>, vector<16x64xf32> -> vector<16x64xf32>
    %25 = arith.divf %23, %24 : vector<16x64xf32>
    %cst_12 = arith.constant dense<0.000000e+00> : vector<16x32xf32>
    %26 = tpu.matmul %25, %16, %cst_12 {dimension_numbers = #tpu.dot_dimension_numbers<[1], [0], [0], [1], [0, 0, 1, 1], [], []>} : vector<16x64xf32>, vector<64x32xf32>, vector<16x32xf32> -> vector<16x32xf32>
    %c208 = arith.constant 208 : index
    %c0_13 = arith.constant 0 : index
    %27 = vector.load %arg1[%c208, %c0_13] : memref<512x128xf32, #tpu.memory_space<vmem>>, vector<32x32xf32>
    %cst_14 = arith.constant dense<0.000000e+00> : vector<16x32xf32>
    %28 = tpu.matmul %26, %27, %cst_14 {dimension_numbers = #tpu.dot_dimension_numbers<[1], [0], [0], [1], [0, 0, 1, 1], [], []>} : vector<16x32xf32>, vector<32x32xf32>, vector<16x32xf32> -> vector<16x32xf32>
    %c336 = arith.constant 336 : index
    %c0_15 = arith.constant 0 : index
    %29 = vector.load %arg1[%c336, %c0_15] : memref<512x128xf32, #tpu.memory_space<vmem>>, vector<1x32xf32>
    %30 = vector.broadcast %29 : vector<1x32xf32> to vector<16x32xf32>
    %31 = arith.addf %28, %30 : vector<16x32xf32>
    %32 = arith.addf %31, %7 : vector<16x32xf32>
    %c337 = arith.constant 337 : index
    %c0_16 = arith.constant 0 : index
    %33 = vector.load %arg1[%c337, %c0_16] : memref<512x128xf32, #tpu.memory_space<vmem>>, vector<1x32xf32>
    %c338 = arith.constant 338 : index
    %c0_17 = arith.constant 0 : index
    %34 = vector.load %arg1[%c338, %c0_17] : memref<512x128xf32, #tpu.memory_space<vmem>>, vector<1x32xf32>
    %cst_18 = arith.constant dense<0.000000e+00> : vector<16xf32>
    %35 = vector.multi_reduction <add>, %32, %cst_18 [1] : vector<16x32xf32> to vector<16xf32>
    %36 = vector.shape_cast %35 : vector<16xf32> to vector<16x1xf32>
    %cst_19 = arith.constant 3.200000e+01 : f32
    %37 = vector.broadcast %cst_19 : f32 to vector<16x1xf32>
    %38 = arith.divf %36, %37 : vector<16x1xf32>
    %39 = vector.broadcast %38 : vector<16x1xf32> to vector<16x32xf32>
    %40 = arith.subf %32, %39 : vector<16x32xf32>
    %41 = arith.mulf %40, %40 : vector<16x32xf32>
    %cst_20 = arith.constant dense<0.000000e+00> : vector<16xf32>
    %42 = vector.multi_reduction <add>, %41, %cst_20 [1] : vector<16x32xf32> to vector<16xf32>
    %43 = vector.shape_cast %42 : vector<16xf32> to vector<16x1xf32>
    %cst_21 = arith.constant 3.200000e+01 : f32
    %44 = vector.broadcast %cst_21 : f32 to vector<16x1xf32>
    %45 = arith.divf %43, %44 : vector<16x1xf32>
    %46 = vector.broadcast %38 : vector<16x1xf32> to vector<16x32xf32>
    %47 = arith.subf %32, %46 : vector<16x32xf32>
    %cst_22 = arith.constant 9.99999974E-6 : f32
    %48 = vector.broadcast %cst_22 : f32 to vector<16x1xf32>
    %49 = arith.addf %45, %48 : vector<16x1xf32>
    %50 = math.rsqrt %49 : vector<16x1xf32>
    %51 = vector.broadcast %50 : vector<16x1xf32> to vector<16x32xf32>
    %52 = arith.mulf %47, %51 : vector<16x32xf32>
    %53 = vector.broadcast %33 : vector<1x32xf32> to vector<16x32xf32>
    %54 = arith.mulf %52, %53 : vector<16x32xf32>
    %55 = vector.broadcast %34 : vector<1x32xf32> to vector<16x32xf32>
    %56 = arith.addf %54, %55 : vector<16x32xf32>
    %c240 = arith.constant 240 : index
    %c0_23 = arith.constant 0 : index
    %57 = vector.load %arg1[%c240, %c0_23] : memref<512x128xf32, #tpu.memory_space<vmem>>, vector<32x64xf32>
    %cst_24 = arith.constant dense<0.000000e+00> : vector<16x64xf32>
    %58 = tpu.matmul %56, %57, %cst_24 {dimension_numbers = #tpu.dot_dimension_numbers<[1], [0], [0], [1], [0, 0, 1, 1], [], []>} : vector<16x32xf32>, vector<32x64xf32>, vector<16x64xf32> -> vector<16x64xf32>
    %c339 = arith.constant 339 : index
    %c0_25 = arith.constant 0 : index
    %59 = vector.load %arg1[%c339, %c0_25] : memref<512x128xf32, #tpu.memory_space<vmem>>, vector<1x64xf32>
    %60 = vector.broadcast %59 : vector<1x64xf32> to vector<16x64xf32>
    %61 = arith.addf %58, %60 : vector<16x64xf32>
    %cst_26 = arith.constant 0.000000e+00 : f32
    %62 = vector.broadcast %cst_26 : f32 to vector<16x64xf32>
    %63 = arith.maximumf %61, %62 : vector<16x64xf32>
    %c272 = arith.constant 272 : index
    %c0_27 = arith.constant 0 : index
    %64 = vector.load %arg1[%c272, %c0_27] : memref<512x128xf32, #tpu.memory_space<vmem>>, vector<64x32xf32>
    %cst_28 = arith.constant dense<0.000000e+00> : vector<16x32xf32>
    %65 = tpu.matmul %63, %64, %cst_28 {dimension_numbers = #tpu.dot_dimension_numbers<[1], [0], [0], [1], [0, 0, 1, 1], [], []>} : vector<16x64xf32>, vector<64x32xf32>, vector<16x32xf32> -> vector<16x32xf32>
    %c340 = arith.constant 340 : index
    %c0_29 = arith.constant 0 : index
    %66 = vector.load %arg1[%c340, %c0_29] : memref<512x128xf32, #tpu.memory_space<vmem>>, vector<1x32xf32>
    %67 = vector.broadcast %66 : vector<1x32xf32> to vector<16x32xf32>
    %68 = arith.addf %65, %67 : vector<16x32xf32>
    %69 = arith.addf %68, %56 : vector<16x32xf32>
    %c341 = arith.constant 341 : index
    %c0_30 = arith.constant 0 : index
    %70 = vector.load %arg1[%c341, %c0_30] : memref<512x128xf32, #tpu.memory_space<vmem>>, vector<1x32xf32>
    %c342 = arith.constant 342 : index
    %c0_31 = arith.constant 0 : index
    %71 = vector.load %arg1[%c342, %c0_31] : memref<512x128xf32, #tpu.memory_space<vmem>>, vector<1x32xf32>
    %cst_32 = arith.constant dense<0.000000e+00> : vector<16xf32>
    %72 = vector.multi_reduction <add>, %69, %cst_32 [1] : vector<16x32xf32> to vector<16xf32>
    %73 = vector.shape_cast %72 : vector<16xf32> to vector<16x1xf32>
    %cst_33 = arith.constant 3.200000e+01 : f32
    %74 = vector.broadcast %cst_33 : f32 to vector<16x1xf32>
    %75 = arith.divf %73, %74 : vector<16x1xf32>
    %76 = vector.broadcast %75 : vector<16x1xf32> to vector<16x32xf32>
    %77 = arith.subf %69, %76 : vector<16x32xf32>
    %78 = arith.mulf %77, %77 : vector<16x32xf32>
    %cst_34 = arith.constant dense<0.000000e+00> : vector<16xf32>
    %79 = vector.multi_reduction <add>, %78, %cst_34 [1] : vector<16x32xf32> to vector<16xf32>
    %80 = vector.shape_cast %79 : vector<16xf32> to vector<16x1xf32>
    %cst_35 = arith.constant 3.200000e+01 : f32
    %81 = vector.broadcast %cst_35 : f32 to vector<16x1xf32>
    %82 = arith.divf %80, %81 : vector<16x1xf32>
    %83 = vector.broadcast %75 : vector<16x1xf32> to vector<16x32xf32>
    %84 = arith.subf %69, %83 : vector<16x32xf32>
    %cst_36 = arith.constant 9.99999974E-6 : f32
    %85 = vector.broadcast %cst_36 : f32 to vector<16x1xf32>
    %86 = arith.addf %82, %85 : vector<16x1xf32>
    %87 = math.rsqrt %86 : vector<16x1xf32>
    %88 = vector.broadcast %87 : vector<16x1xf32> to vector<16x32xf32>
    %89 = arith.mulf %84, %88 : vector<16x32xf32>
    %90 = vector.broadcast %70 : vector<1x32xf32> to vector<16x32xf32>
    %91 = arith.mulf %89, %90 : vector<16x32xf32>
    %92 = vector.broadcast %71 : vector<1x32xf32> to vector<16x32xf32>
    %93 = arith.addf %91, %92 : vector<16x32xf32>
    %c344 = arith.constant 344 : index
    %c0_37 = arith.constant 0 : index
    %94 = vector.load %arg1[%c344, %c0_37] : memref<512x128xf32, #tpu.memory_space<vmem>>, vector<32x96xf32>
    %cst_38 = arith.constant dense<0.000000e+00> : vector<16x96xf32>
    %95 = tpu.matmul %93, %94, %cst_38 {dimension_numbers = #tpu.dot_dimension_numbers<[1], [0], [0], [1], [0, 0, 1, 1], [], []>} : vector<16x32xf32>, vector<32x96xf32>, vector<16x96xf32> -> vector<16x96xf32>
    %96 = vector.extract_strided_slice %95 {offsets = [0, 0], sizes = [16, 32], strides = [1, 1]} : vector<16x96xf32> to vector<16x32xf32>
    %97 = vector.extract_strided_slice %95 {offsets = [0, 32], sizes = [16, 32], strides = [1, 1]} : vector<16x96xf32> to vector<16x32xf32>
    %98 = vector.extract_strided_slice %95 {offsets = [0, 64], sizes = [16, 32], strides = [1, 1]} : vector<16x96xf32> to vector<16x32xf32>
    %99 = tpu.concatenate %97, %97, %97, %97 in 0 : vector<16x32xf32>, vector<16x32xf32>, vector<16x32xf32>, vector<16x32xf32> -> vector<64x32xf32>
    %100 = arith.mulf %99, %2 : vector<64x32xf32>
    %101 = tpu.concatenate %98, %98, %98, %98 in 0 : vector<16x32xf32>, vector<16x32xf32>, vector<16x32xf32>, vector<16x32xf32> -> vector<64x32xf32>
    %102 = arith.mulf %101, %2 : vector<64x32xf32>
    %cst_39 = arith.constant dense<0.000000e+00> : vector<16x64xf32>
    %103 = tpu.matmul %96, %100, %cst_39 {dimension_numbers = #tpu.dot_dimension_numbers<[1], [1], [0], [0], [0, 0, 1, 0], [], []>} : vector<16x32xf32>, vector<64x32xf32>, vector<16x64xf32> -> vector<16x64xf32>
    %104 = arith.addf %103, %1 : vector<16x64xf32>
    %cst_40 = arith.constant dense<0xFF800000> : vector<16xf32>
    %105 = vector.multi_reduction <maximumf>, %104, %cst_40 [1] : vector<16x64xf32> to vector<16xf32>
    %106 = vector.shape_cast %105 : vector<16xf32> to vector<16x1xf32>
    %107 = vector.broadcast %106 : vector<16x1xf32> to vector<16x64xf32>
    %108 = arith.subf %104, %107 : vector<16x64xf32>
    %109 = math.exp %108 : vector<16x64xf32>
    %cst_41 = arith.constant dense<0.000000e+00> : vector<16x64xf32>
    %110 = tpu.matmul %109, %3, %cst_41 {dimension_numbers = #tpu.dot_dimension_numbers<[1], [0], [0], [1], [0, 0, 1, 1], [], []>} : vector<16x64xf32>, vector<64x64xf32>, vector<16x64xf32> -> vector<16x64xf32>
    %111 = arith.divf %109, %110 : vector<16x64xf32>
    %cst_42 = arith.constant dense<0.000000e+00> : vector<16x32xf32>
    %112 = tpu.matmul %111, %102, %cst_42 {dimension_numbers = #tpu.dot_dimension_numbers<[1], [0], [0], [1], [0, 0, 1, 1], [], []>} : vector<16x64xf32>, vector<64x32xf32>, vector<16x32xf32> -> vector<16x32xf32>
    %c376 = arith.constant 376 : index
    %c0_43 = arith.constant 0 : index
    %113 = vector.load %arg1[%c376, %c0_43] : memref<512x128xf32, #tpu.memory_space<vmem>>, vector<32x32xf32>
    %cst_44 = arith.constant dense<0.000000e+00> : vector<16x32xf32>
    %114 = tpu.matmul %112, %113, %cst_44 {dimension_numbers = #tpu.dot_dimension_numbers<[1], [0], [0], [1], [0, 0, 1, 1], [], []>} : vector<16x32xf32>, vector<32x32xf32>, vector<16x32xf32> -> vector<16x32xf32>
    %c504 = arith.constant 504 : index
    %c0_45 = arith.constant 0 : index
    %115 = vector.load %arg1[%c504, %c0_45] : memref<512x128xf32, #tpu.memory_space<vmem>>, vector<1x32xf32>
    %116 = vector.broadcast %115 : vector<1x32xf32> to vector<16x32xf32>
    %117 = arith.addf %114, %116 : vector<16x32xf32>
    %118 = arith.addf %117, %93 : vector<16x32xf32>
    %c505 = arith.constant 505 : index
    %c0_46 = arith.constant 0 : index
    %119 = vector.load %arg1[%c505, %c0_46] : memref<512x128xf32, #tpu.memory_space<vmem>>, vector<1x32xf32>
    %c506 = arith.constant 506 : index
    %c0_47 = arith.constant 0 : index
    %120 = vector.load %arg1[%c506, %c0_47] : memref<512x128xf32, #tpu.memory_space<vmem>>, vector<1x32xf32>
    %cst_48 = arith.constant dense<0.000000e+00> : vector<16xf32>
    %121 = vector.multi_reduction <add>, %118, %cst_48 [1] : vector<16x32xf32> to vector<16xf32>
    %122 = vector.shape_cast %121 : vector<16xf32> to vector<16x1xf32>
    %cst_49 = arith.constant 3.200000e+01 : f32
    %123 = vector.broadcast %cst_49 : f32 to vector<16x1xf32>
    %124 = arith.divf %122, %123 : vector<16x1xf32>
    %125 = vector.broadcast %124 : vector<16x1xf32> to vector<16x32xf32>
    %126 = arith.subf %118, %125 : vector<16x32xf32>
    %127 = arith.mulf %126, %126 : vector<16x32xf32>
    %cst_50 = arith.constant dense<0.000000e+00> : vector<16xf32>
    %128 = vector.multi_reduction <add>, %127, %cst_50 [1] : vector<16x32xf32> to vector<16xf32>
    %129 = vector.shape_cast %128 : vector<16xf32> to vector<16x1xf32>
    %cst_51 = arith.constant 3.200000e+01 : f32
    %130 = vector.broadcast %cst_51 : f32 to vector<16x1xf32>
    %131 = arith.divf %129, %130 : vector<16x1xf32>
    %132 = vector.broadcast %124 : vector<16x1xf32> to vector<16x32xf32>
    %133 = arith.subf %118, %132 : vector<16x32xf32>
    %cst_52 = arith.constant 9.99999974E-6 : f32
    %134 = vector.broadcast %cst_52 : f32 to vector<16x1xf32>
    %135 = arith.addf %131, %134 : vector<16x1xf32>
    %136 = math.rsqrt %135 : vector<16x1xf32>
    %137 = vector.broadcast %136 : vector<16x1xf32> to vector<16x32xf32>
    %138 = arith.mulf %133, %137 : vector<16x32xf32>
    %139 = vector.broadcast %119 : vector<1x32xf32> to vector<16x32xf32>
    %140 = arith.mulf %138, %139 : vector<16x32xf32>
    %141 = vector.broadcast %120 : vector<1x32xf32> to vector<16x32xf32>
    %142 = arith.addf %140, %141 : vector<16x32xf32>
    %c408 = arith.constant 408 : index
    %c0_53 = arith.constant 0 : index
    %143 = vector.load %arg1[%c408, %c0_53] : memref<512x128xf32, #tpu.memory_space<vmem>>, vector<32x64xf32>
    %cst_54 = arith.constant dense<0.000000e+00> : vector<16x64xf32>
    %144 = tpu.matmul %142, %143, %cst_54 {dimension_numbers = #tpu.dot_dimension_numbers<[1], [0], [0], [1], [0, 0, 1, 1], [], []>} : vector<16x32xf32>, vector<32x64xf32>, vector<16x64xf32> -> vector<16x64xf32>
    %c507 = arith.constant 507 : index
    %c0_55 = arith.constant 0 : index
    %145 = vector.load %arg1[%c507, %c0_55] : memref<512x128xf32, #tpu.memory_space<vmem>>, vector<1x64xf32>
    %146 = vector.broadcast %145 : vector<1x64xf32> to vector<16x64xf32>
    %147 = arith.addf %144, %146 : vector<16x64xf32>
    %cst_56 = arith.constant 0.000000e+00 : f32
    %148 = vector.broadcast %cst_56 : f32 to vector<16x64xf32>
    %149 = arith.maximumf %147, %148 : vector<16x64xf32>
    %c440 = arith.constant 440 : index
    %c0_57 = arith.constant 0 : index
    %150 = vector.load %arg1[%c440, %c0_57] : memref<512x128xf32, #tpu.memory_space<vmem>>, vector<64x32xf32>
    %cst_58 = arith.constant dense<0.000000e+00> : vector<16x32xf32>
    %151 = tpu.matmul %149, %150, %cst_58 {dimension_numbers = #tpu.dot_dimension_numbers<[1], [0], [0], [1], [0, 0, 1, 1], [], []>} : vector<16x64xf32>, vector<64x32xf32>, vector<16x32xf32> -> vector<16x32xf32>
    %c508 = arith.constant 508 : index
    %c0_59 = arith.constant 0 : index
    %152 = vector.load %arg1[%c508, %c0_59] : memref<512x128xf32, #tpu.memory_space<vmem>>, vector<1x32xf32>
    %153 = vector.broadcast %152 : vector<1x32xf32> to vector<16x32xf32>
    %154 = arith.addf %151, %153 : vector<16x32xf32>
    %155 = arith.addf %154, %142 : vector<16x32xf32>
    %c509 = arith.constant 509 : index
    %c0_60 = arith.constant 0 : index
    %156 = vector.load %arg1[%c509, %c0_60] : memref<512x128xf32, #tpu.memory_space<vmem>>, vector<1x32xf32>
    %c510 = arith.constant 510 : index
    %c0_61 = arith.constant 0 : index
    %157 = vector.load %arg1[%c510, %c0_61] : memref<512x128xf32, #tpu.memory_space<vmem>>, vector<1x32xf32>
    %cst_62 = arith.constant dense<0.000000e+00> : vector<16xf32>
    %158 = vector.multi_reduction <add>, %155, %cst_62 [1] : vector<16x32xf32> to vector<16xf32>
    %159 = vector.shape_cast %158 : vector<16xf32> to vector<16x1xf32>
    %cst_63 = arith.constant 3.200000e+01 : f32
    %160 = vector.broadcast %cst_63 : f32 to vector<16x1xf32>
    %161 = arith.divf %159, %160 : vector<16x1xf32>
    %162 = vector.broadcast %161 : vector<16x1xf32> to vector<16x32xf32>
    %163 = arith.subf %155, %162 : vector<16x32xf32>
    %164 = arith.mulf %163, %163 : vector<16x32xf32>
    %cst_64 = arith.constant dense<0.000000e+00> : vector<16xf32>
    %165 = vector.multi_reduction <add>, %164, %cst_64 [1] : vector<16x32xf32> to vector<16xf32>
    %166 = vector.shape_cast %165 : vector<16xf32> to vector<16x1xf32>
    %cst_65 = arith.constant 3.200000e+01 : f32
    %167 = vector.broadcast %cst_65 : f32 to vector<16x1xf32>
    %168 = arith.divf %166, %167 : vector<16x1xf32>
    %169 = vector.broadcast %161 : vector<16x1xf32> to vector<16x32xf32>
    %170 = arith.subf %155, %169 : vector<16x32xf32>
    %cst_66 = arith.constant 9.99999974E-6 : f32
    %171 = vector.broadcast %cst_66 : f32 to vector<16x1xf32>
    %172 = arith.addf %168, %171 : vector<16x1xf32>
    %173 = math.rsqrt %172 : vector<16x1xf32>
    %174 = vector.broadcast %173 : vector<16x1xf32> to vector<16x32xf32>
    %175 = arith.mulf %170, %174 : vector<16x32xf32>
    %176 = vector.broadcast %156 : vector<1x32xf32> to vector<16x32xf32>
    %177 = arith.mulf %175, %176 : vector<16x32xf32>
    %178 = vector.broadcast %157 : vector<1x32xf32> to vector<16x32xf32>
    %179 = arith.addf %177, %178 : vector<16x32xf32>
    %c0_67 = arith.constant 0 : index
    %c0_68 = arith.constant 0 : index
    %180 = vector.load %arg2[%c0_67, %c0_68] : memref<16x32xf32, #tpu.memory_space<vmem>>, vector<16x32xf32>
    tpu.vector_store %arg2[%c0_67, %c0_68], %179 {strides = array<i32>} : memref<16x32xf32, #tpu.memory_space<vmem>>, vector<16x32xf32>,
    return
  }
}

</mosaic_0001>

<llo_original>
// kernel: tpu_custom_call.1
$region0: #{tpu_custom_call.1}
  #allocation0 [shape = 'u32[]', space=smem, size = 0x4, offset = 0x4, fixed_abs, tag = 'smem constant byte address 0x4 - core index']
  #allocation1 [shape = 'u32[72,128]{1,0:T(1,128)}', space=vmem, size = 0x9000, scoped, tag = 'internal scratch']
  %s0 = inlined_call_operand.hbm [shape: f32[16,16], index: 0, kind: input, shape index: {}]
  %s1 = inlined_call_operand.hbm [shape: f32[512,128], index: 1, kind: input, shape index: {}]
  %s2 = inlined_call_operand.hbm [shape: f32[16,32], index: 2, kind: output, shape index: {}]
  %s3 = sld [smem:[#allocation0]]
  $region26: #{tpu_custom_call.1} parent=0
    _
  %s5 = ssub.s32 1, %s3
  %s6 = scalar_select 0, %s5, %s3
  $region1: #{tpu_custom_call.1} parent=0
    #allocation2 [shape = 'u8[8192]{0}', space=vmem, size = 0x2000, scoped, tag = 'input window, operand 0, single buffered']
    #allocation3 [shape = 's32[1]{0}', space=sflag, size = 0x4, scoped, tag = 'scoped memory for tpu_custom_call.1']
    #allocation4 [shape = 's32[1]{0}', space=sflag, size = 0x4, scoped, tag = 'scoped memory for tpu_custom_call.1']
    #allocation5 [shape = 'u8[262144]{0}', space=vmem, size = 0x40000, scoped, tag = 'input window, operand 1, single buffered']
    #allocation6 [shape = 's32[1]{0}', space=sflag, size = 0x4, scoped, tag = 'scoped memory for tpu_custom_call.1']
    #allocation7 [shape = 'u8[8192]{0}', space=vmem, size = 0x2000, scoped, tag = 'output window, operand 0, single buffered']
    %7 = vsyncpa [#allocation3], 0
    %8 = vsyncpa [#allocation6], 0
    %9 = vsyncpa [#allocation4], 0
    // Predicated region
    $region2: #{tpu_custom_call.1} parent=1 // pred_check
      _
    $region3: #{tpu_custom_call.1} parent=1 // pred_check_branch
      %11 = sbr.rel (0) target = $region5
    $region4: #{tpu_custom_call.1} parent=1 // pred_region
      %13 = vsyncadd [#allocation3], 0
      %s14 = sshll.u32 %s0, 4
      %s15 = int_to_ptr.hbm [resolvable:$true] %s14
      %s16 = sshll.u32 [#allocation2], 4
      %s17 = int_to_ptr.vmem [resolvable:$true] %s16
      %22 = dma.hbm_to_vmem [thread:$0]  %s15, 256, %s17, [#allocation3], 128, 128, 8
    $region5: #{tpu_custom_call.1} parent=1 // pred_fallthru
      _
    // Predicated region
    $region6: #{tpu_custom_call.1} parent=1 // pred_check
      _
    $region7: #{tpu_custom_call.1} parent=1 // pred_check_branch
      %24 = sbr.rel (0) target = $region9
    $region8: #{tpu_custom_call.1} parent=1 // pred_region
      %26 = vsyncadd [#allocation6], 0
      %s27 = sshll.u32 %s1, 4
      %s28 = int_to_ptr.hbm [resolvable:$true] %s27
      %s29 = sshll.u32 [#allocation5], 4
      %s30 = int_to_ptr.vmem [resolvable:$true] %s29
      %35 = dma.hbm_to_vmem [thread:$0]  %s28, 8192, %s30, [#allocation6], 128, 128, 8
    $region9: #{tpu_custom_call.1} parent=1 // pred_fallthru
      _
    // Predicated region
    $region10: #{tpu_custom_call.1} parent=1 // pred_check
      _
    $region11: #{tpu_custom_call.1} parent=1 // pred_check_branch
      %37 = sbr.rel (0) target = $region13
    $region12: #{tpu_custom_call.1} parent=1 // pred_region
      %39 = dma.done [#allocation3], 256
    $region13: #{tpu_custom_call.1} parent=1 // pred_fallthru
      _
    // Predicated region
    $region14: #{tpu_custom_call.1} parent=1 // pred_check
      _
    $region15: #{tpu_custom_call.1} parent=1 // pred_check_branch
      %41 = sbr.rel (0) target = $region17
    $region16: #{tpu_custom_call.1} parent=1 // pred_region
      %43 = dma.done [#allocation6], 8192
    $region17: #{tpu_custom_call.1} parent=1 // pred_fallthru
      _
    %v44 = vld [vmem:[#allocation2] sm:$0xff]
    %v45 = vld [vmem:[#allocation2 + $0x8] sm:$0xff]
    %v46 = vld [vmem:[#allocation5 + $0x20] sm:$0xff]
    %v47 = vld [vmem:[#allocation5 + $0x28] sm:$0xff]
    %v48 = vld [vmem:[#allocation5 + $0x30] sm:$0xff]
    %v49 = vld [vmem:[#allocation5 + $0x38] sm:$0xff]
    %v50 = vld [vmem:[#allocation5 + $0x40] sm:$0xff]
    %v51 = vld [vmem:[#allocation5 + $0x48] sm:$0xff]
    %v52 = vld [vmem:[#allocation5 + $0x50] sm:$0xff]
    %v53 = vld [vmem:[#allocation5 + $0x58] sm:$0xff]
    %v54 = vld [vmem:[#allocation5 + $0x60] sm:$0xff]
    %v55 = vld [vmem:[#allocation5 + $0x68] sm:$0xff]
    %v56 = vld [vmem:[#allocation5 + $0x70] sm:$0xff]
    %v57 = vld [vmem:[#allocation5 + $0x78] sm:$0xff]
    %v58 = vld [vmem:[#allocation5 + $0x80] sm:$0xff]
    %v59 = vld [vmem:[#allocation5 + $0x88] sm:$0xff]
    %v60 = vld [vmem:[#allocation5 + $0x90] sm:$0xff]
    %v61 = vld [vmem:[#allocation5 + $0x98] sm:$0xff]
    %v62 = vld [vmem:[#allocation5 + $0xa0] sm:$0xff]
    %v63 = vld [vmem:[#allocation5 + $0xa8] sm:$0xff]
    %v64 = vld [vmem:[#allocation5] sm:$0xff]
    %v65 = vld [vmem:[#allocation5 + $0x8] sm:$0xff]
    %v66 = vld [vmem:[#allocation5 + $0x10] sm:$0xff]
    %v67 = vld [vmem:[#allocation5 + $0x18] sm:$0xff]
    %vm68 = vcmask 130048
    %v70 = vsel %vm68, %v44, 0
    %v73 = vsel %vm68, %v45, 0
    %75 = vmatpush.msra.mxu0 0.0
    %76 = vmatpush.msra.mxu0 0.0
    %77 = vmatpush.msra.mxu0 0.0
    %78 = vmatpush.msra.mxu0 0.0
    %79 = vmatpush.msra.mxu0 0.0
    %80 = vmatpush.msra.mxu0 0.0
    %81 = vmatpush.msra.mxu0 0.0
    %82 = vmatpush.msra.mxu0 0.0
    %83 = vmatpush.msra.mxu0 0.0
    %84 = vmatpush.msra.mxu0 0.0
    %85 = vmatpush.msra.mxu0 0.0
    %86 = vmatpush.msra.mxu0 0.0
    %87 = vmatpush.msra.mxu0 0.0
    %88 = vmatpush.msra.mxu0 0.0
    %89 = vmatpush.msra.mxu0 %v65
    %90 = vmatpush.msra.mxu0 %v64
    %91 = vmatmul.f32.gmra.mxu0 %v70
    %v92 = vpop.f32.mrf.mxu0
    %v93 = vadd.f32 %v66, %v92
    %94 = vmatmul.f32.gmra.mxu0 %v73
    %v95 = vpop.f32.mrf.mxu0
    %v96 = vadd.f32 %v67, %v95
    %97 = vdwg.mxu0
    %v98 = vld [vmem:[#allocation5 + $0xb0] sm:$0xff]
    %v99 = vld [vmem:[#allocation5 + $0xb8] sm:$0xff]
    %v100 = vld [vmem:[#allocation5 + $0xc0] sm:$0xff]
    %v101 = vld [vmem:[#allocation5 + $0xc8] sm:$0xff]
    %vm102 = vcmask 261120
    %v104 = vsel %vm102, %v93, 0
    %v107 = vsel %vm102, %v96, 0
    %109 = vmatpush.msra.mxu0 0.0
    %110 = vmatpush.msra.mxu0 0.0
    %111 = vmatpush.msra.mxu0 0.0
    %112 = vmatpush.msra.mxu0 0.0
    %113 = vmatpush.msra.mxu0 0.0
    %114 = vmatpush.msra.mxu0 0.0
    %115 = vmatpush.msra.mxu0 0.0
    %116 = vmatpush.msra.mxu0 0.0
    %117 = vmatpush.msra.mxu0 0.0
    %118 = vmatpush.msra.mxu0 0.0
    %119 = vmatpush.msra.mxu0 0.0
    %120 = vmatpush.msra.mxu0 0.0
    %121 = vmatpush.msra.mxu0 %v101
    %122 = vmatpush.msra.mxu0 %v100
    %123 = vmatpush.msra.mxu0 %v99
    %124 = vmatpush.msra.mxu0 %v98
    %125 = vmatmul.f32.gmra.mxu0 %v104
    %v126 = vpop.f32.mrf.mxu0
    %v127 = vadd.f32 0.0, %v126
    %128 = vmatmul.f32.gmra.mxu0 %v107
    %v129 = vpop.f32.mrf.mxu0
    %v130 = vadd.f32 0.0, %v129
    %131 = vdwg.mxu0
    %140 = vrot.lane.b32.xlu0 %v48, 32
    %v141 = vpop.permute.xlu0 %140
    %142 = vrot.lane.b32.xlu0 %v49, 32
    %v143 = vpop.permute.xlu0 %142
    %144 = vrot.lane.b32.xlu0 %v50, 32
    %v145 = vpop.permute.xlu0 %144
    %146 = vrot.lane.b32.xlu0 %v51, 32
    %v147 = vpop.permute.xlu0 %146
    %148 = vrot.lane.b32.xlu0 %v52, 32
    %v149 = vpop.permute.xlu0 %148
    %150 = vrot.lane.b32.xlu0 %v53, 32
    %v151 = vpop.permute.xlu0 %150
    %152 = vrot.lane.b32.xlu0 %v54, 32
    %v153 = vpop.permute.xlu0 %152
    %154 = vrot.lane.b32.xlu0 %v55, 32
    %v155 = vpop.permute.xlu0 %154
    %v164 = vmul.f32 %v127, %v141
    %v165 = vmul.f32 %v130, %v143
    %v166 = vmul.f32 %v127, %v145
    %v167 = vmul.f32 %v130, %v147
    %v168 = vmul.f32 %v127, %v149
    %v169 = vmul.f32 %v130, %v151
    %v170 = vmul.f32 %v127, %v153
    %v171 = vmul.f32 %v130, %v155
    %172 = vrot.lane.b32.xlu0 %v48, 64
    %v173 = vpop.permute.xlu0 %172
    %174 = vrot.lane.b32.xlu0 %v49, 64
    %v175 = vpop.permute.xlu0 %174
    %176 = vrot.lane.b32.xlu0 %v50, 64
    %v177 = vpop.permute.xlu0 %176
    %178 = vrot.lane.b32.xlu0 %v51, 64
    %v179 = vpop.permute.xlu0 %178
    %180 = vrot.lane.b32.xlu0 %v52, 64
    %v181 = vpop.permute.xlu0 %180
    %182 = vrot.lane.b32.xlu0 %v53, 64
    %v183 = vpop.permute.xlu0 %182
    %184 = vrot.lane.b32.xlu0 %v54, 64
    %v185 = vpop.permute.xlu0 %184
    %186 = vrot.lane.b32.xlu0 %v55, 64
    %v187 = vpop.permute.xlu0 %186
    %v196 = vmul.f32 %v127, %v173
    %v197 = vmul.f32 %v130, %v175
    %v198 = vmul.f32 %v127, %v177
    %v199 = vmul.f32 %v130, %v179
    %v200 = vmul.f32 %v127, %v181
    %v201 = vmul.f32 %v130, %v183
    %v202 = vmul.f32 %v127, %v185
    %v203 = vmul.f32 %v130, %v187
    %212 = vrot.lane.b32.xlu0 %v164, 96
    %v213 = vpop.permute.xlu0 %212
    %214 = vrot.lane.b32.xlu0 %v165, 96
    %v215 = vpop.permute.xlu0 %214
    %216 = vrot.lane.b32.xlu0 %v166, 96
    %v217 = vpop.permute.xlu0 %216
    %218 = vrot.lane.b32.xlu0 %v167, 96
    %v219 = vpop.permute.xlu0 %218
    %220 = vrot.lane.b32.xlu0 %v168, 96
    %v221 = vpop.permute.xlu0 %220
    %222 = vrot.lane.b32.xlu0 %v169, 96
    %v223 = vpop.permute.xlu0 %222
    %224 = vrot.lane.b32.xlu0 %v170, 96
    %v225 = vpop.permute.xlu0 %224
    %226 = vrot.lane.b32.xlu0 %v171, 96
    %v227 = vpop.permute.xlu0 %226
    %v229 = vsel %vm102, %v127, 0
    %v232 = vsel %vm102, %v130, 0
    %v234 = vsel %vm102, %v213, 0
    %v236 = vsel %vm102, %v215, 0
    %v238 = vsel %vm102, %v217, 0
    %v240 = vsel %vm102, %v219, 0
    %v242 = vsel %vm102, %v221, 0
    %v244 = vsel %vm102, %v223, 0
    %v246 = vsel %vm102, %v225, 0
    %v248 = vsel %vm102, %v227, 0
    %250 = vmatpush.xpose.msra.mxu0 0.0
    %251 = vmatpush.xpose.msra.mxu0 0.0
    %252 = vmatpush.xpose.msra.mxu0 0.0
    %253 = vmatpush.xpose.msra.mxu0 0.0
    %254 = vmatpush.xpose.msra.mxu0 0.0
    %255 = vmatpush.xpose.msra.mxu0 0.0
    %256 = vmatpush.xpose.msra.mxu0 0.0
    %257 = vmatpush.xpose.msra.mxu0 0.0
    %258 = vmatpush.xpose.msra.mxu0 %v248
    %259 = vmatpush.xpose.msra.mxu0 %v246
    %260 = vmatpush.xpose.msra.mxu0 %v244
    %261 = vmatpush.xpose.msra.mxu0 %v242
    %262 = vmatpush.xpose.msra.mxu0 %v240
    %263 = vmatpush.xpose.msra.mxu0 %v238
    %264 = vmatpush.xpose.msra.mxu0 %v236
    %265 = vmatpush.xpose.msra.mxu0 %v234
    %266 = vmatmul.f32.gmra.mxu0 %v229
    %v267 = vpop.f32.mrf.mxu0
    %v268 = vadd.f32 %v46, %v267
    %269 = vmatmul.f32.gmra.mxu0 %v232
    %v270 = vpop.f32.mrf.mxu0
    %v271 = vadd.f32 %v47, %v270
    %272 = vdwg.mxu0
    %vm273 = vcmask 523264
    %v274 = vsel %vm273, %v268, -inf
    %275 = vmax.xlane.f32.xlu0 %v274
    %v276 = vpop.xlane.xlu0 %275
    %v277 = vsel %vm273, %v271, -inf
    %278 = vmax.xlane.f32.xlu0 %v277
    %v279 = vpop.xlane.xlu0 %278
    %v280 = vsub.f32 %v268, %v276
    %v281 = vsub.f32 %v271, %v279
    %v282 = vmul.f32 %v280, 1.442695
    %v283 = vpow.pop %v282
    %v284 = vmul.f32 %v281, 1.442695
    %v285 = vpow.pop %v284
    %v287 = vsel %vm273, %v283, 0
    %v290 = vsel %vm273, %v285, 0
    %292 = vmatpush.msra.mxu0 0.0
    %293 = vmatpush.msra.mxu0 0.0
    %294 = vmatpush.msra.mxu0 0.0
    %295 = vmatpush.msra.mxu0 0.0
    %296 = vmatpush.msra.mxu0 0.0
    %297 = vmatpush.msra.mxu0 0.0
    %298 = vmatpush.msra.mxu0 0.0
    %299 = vmatpush.msra.mxu0 0.0
    %300 = vmatpush.msra.mxu0 %v63
    %301 = vmatpush.msra.mxu0 %v62
    %302 = vmatpush.msra.mxu0 %v61
    %303 = vmatpush.msra.mxu0 %v60
    %304 = vmatpush.msra.mxu0 %v59
    %305 = vmatpush.msra.mxu0 %v58
    %306 = vmatpush.msra.mxu0 %v57
    %307 = vmatpush.msra.mxu0 %v56
    %308 = vmatmul.f32.gmra.mxu0 %v287
    %v309 = vpop.f32.mrf.mxu0
    %v310 = vadd.f32 0.0, %v309
    %311 = vmatmul.f32.gmra.mxu0 %v290
    %v312 = vpop.f32.mrf.mxu0
    %v313 = vadd.f32 0.0, %v312
    %314 = vdwg.mxu0
    %v315 = vrcp.pop %v310
    %v316 = vmul.f32 %v310, %v315
    %v317 = vsub.f32 1.0, %v316
    %v318 = vmul.f32 %v315, %v317
    %v319 = vadd.f32 %v315, %v318
    %vm320 = vweird.f32 %v310
    %vm321 = vweird.f32 %v315
    %vm322 = vmor %vm320, %vm321
    %v323 = vsel %vm322, %v315, %v319
    %v324 = vand.u32 2147483647, %v310
    %vm325 = vcmp.eq.f32.partialorder %v324, 8.507059e+37
    %v326 = vand.u32 %v310, 2147483648
    %v327 = vor.u32 1.1754944e-38, %v326
    %v328 = vsel %vm325, %v327, %v323
    %v329 = vmul.f32 %v283, %v328
    %v330 = vrcp.pop %v313
    %v331 = vmul.f32 %v313, %v330
    %v332 = vsub.f32 1.0, %v331
    %v333 = vmul.f32 %v330, %v332
    %v334 = vadd.f32 %v330, %v333
    %vm335 = vweird.f32 %v313
    %vm336 = vweird.f32 %v330
    %vm337 = vmor %vm335, %vm336
    %v338 = vsel %vm337, %v330, %v334
    %v339 = vand.u32 2147483647, %v313
    %vm340 = vcmp.eq.f32.partialorder %v339, 8.507059e+37
    %v341 = vand.u32 %v313, 2147483648
    %v342 = vor.u32 1.1754944e-38, %v341
    %v343 = vsel %vm340, %v342, %v338
    %v344 = vmul.f32 %v285, %v343
    %353 = vrot.lane.b32.xlu0 %v196, 64
    %v354 = vpop.permute.xlu0 %353
    %355 = vrot.lane.b32.xlu0 %v197, 64
    %v356 = vpop.permute.xlu0 %355
    %357 = vrot.lane.b32.xlu0 %v198, 64
    %v358 = vpop.permute.xlu0 %357
    %359 = vrot.lane.b32.xlu0 %v199, 64
    %v360 = vpop.permute.xlu0 %359
    %361 = vrot.lane.b32.xlu0 %v200, 64
    %v362 = vpop.permute.xlu0 %361
    %363 = vrot.lane.b32.xlu0 %v201, 64
    %v364 = vpop.permute.xlu0 %363
    %365 = vrot.lane.b32.xlu0 %v202, 64
    %v366 = vpop.permute.xlu0 %365
    %367 = vrot.lane.b32.xlu0 %v203, 64
    %v368 = vpop.permute.xlu0 %367
    %v378 = vsel %vm273, %v329, 0
    %v381 = vsel %vm273, %v344, 0
    %383 = vmatpush.msra.mxu0 0.0
    %384 = vmatpush.msra.mxu0 0.0
    %385 = vmatpush.msra.mxu0 0.0
    %386 = vmatpush.msra.mxu0 0.0
    %387 = vmatpush.msra.mxu0 0.0
    %388 = vmatpush.msra.mxu0 0.0
    %389 = vmatpush.msra.mxu0 0.0
    %390 = vmatpush.msra.mxu0 0.0
    %391 = vmatpush.msra.mxu0 %v368
    %392 = vmatpush.msra.mxu0 %v366
    %393 = vmatpush.msra.mxu0 %v364
    %394 = vmatpush.msra.mxu0 %v362
    %395 = vmatpush.msra.mxu0 %v360
    %396 = vmatpush.msra.mxu0 %v358
    %397 = vmatpush.msra.mxu0 %v356
    %398 = vmatpush.msra.mxu0 %v354
    %399 = vmatmul.f32.gmra.mxu0 %v378
    %v400 = vpop.f32.mrf.mxu0
    %v401 = vadd.f32 0.0, %v400
    %402 = vmatmul.f32.gmra.mxu0 %v381
    %v403 = vpop.f32.mrf.mxu0
    %v404 = vadd.f32 0.0, %v403
    %405 = vdwg.mxu0
    %v406 = vld [vmem:[#allocation5 + $0xd0] sm:$0xff]
    %v407 = vld [vmem:[#allocation5 + $0xd8] sm:$0xff]
    %v408 = vld [vmem:[#allocation5 + $0xe0] sm:$0xff]
    %v409 = vld [vmem:[#allocation5 + $0xe8] sm:$0xff]
    %v410 = vld [vmem:[#allocation5 + $0x150] sm:$0x1]
    %v411 = vperm.slane %v410, 0
    %v413 = vsel %vm102, %v401, 0
    %v416 = vsel %vm102, %v404, 0
    %418 = vmatpush.msra.mxu0 0.0
    %419 = vmatpush.msra.mxu0 0.0
    %420 = vmatpush.msra.mxu0 0.0
    %421 = vmatpush.msra.mxu0 0.0
    %422 = vmatpush.msra.mxu0 0.0
    %423 = vmatpush.msra.mxu0 0.0
    %424 = vmatpush.msra.mxu0 0.0
    %425 = vmatpush.msra.mxu0 0.0
    %426 = vmatpush.msra.mxu0 0.0
    %427 = vmatpush.msra.mxu0 0.0
    %428 = vmatpush.msra.mxu0 0.0
    %429 = vmatpush.msra.mxu0 0.0
    %430 = vmatpush.msra.mxu0 %v409
    %431 = vmatpush.msra.mxu0 %v408
    %432 = vmatpush.msra.mxu0 %v407
    %433 = vmatpush.msra.mxu0 %v406
    %434 = vmatmul.f32.gmra.mxu0 %v413
    %v435 = vpop.f32.mrf.mxu0
    %v436 = vadd.f32 %v411, %v435
    %437 = vmatmul.f32.gmra.mxu0 %v416
    %v438 = vpop.f32.mrf.mxu0
    %v439 = vadd.f32 %v411, %v438
    %440 = vdwg.mxu0
    %v441 = vadd.f32 %v436, %v93
    %v442 = vadd.f32 %v439, %v96
    %v443 = vld [vmem:[#allocation5 + $0x151] sm:$0x1]
    %v444 = vld [vmem:[#allocation5 + $0x152] sm:$0x1]
    %v445 = vsel %vm102, %v441, 0.0
    %446 = vadd.xlane.f32.xlu0 %v445
    %v447 = vpop.xlane.xlu0 %446
    %v448 = vsel %vm102, %v442, 0.0
    %449 = vadd.xlane.f32.xlu0 %v448
    %v450 = vpop.xlane.xlu0 %449
    %v451 = vrcp.pop 32.0
    %v452 = vmul.f32 32.0, %v451
    %v453 = vsub.f32 1.0, %v452
    %v454 = vmul.f32 %v451, %v453
    %v455 = vadd.f32 %v451, %v454
    %vm456 = vweird.f32 %v451
    %v457 = vsel %vm456, %v451, %v455
    %v458 = vmul.f32 %v447, %v457
    %v459 = vmul.f32 %v450, %v457
    %v460 = vsub.f32 %v441, %v458
    %v461 = vsub.f32 %v442, %v459
    %v462 = vmul.f32 %v460, %v460
    %v463 = vmul.f32 %v461, %v461
    %v464 = vsel %vm102, %v462, 0.0
    %465 = vadd.xlane.f32.xlu0 %v464
    %v466 = vpop.xlane.xlu0 %465
    %v467 = vsel %vm102, %v463, 0.0
    %468 = vadd.xlane.f32.xlu0 %v467
    %v469 = vpop.xlane.xlu0 %468
    %v470 = vmul.f32 %v466, %v457
    %v471 = vmul.f32 %v469, %v457
    %v472 = vadd.f32 %v470, 1e-05
    %v473 = vadd.f32 %v471, 1e-05
    %v474 = vrsqrt.pop %v472
    %v475 = vmul.f32 %v474, %v472
    %v476 = vmul.f32 %v475, %v474
    %v477 = vmul.f32 0.5, %v476
    %v478 = vsub.f32 1.5, %v477
    %v479 = vmul.f32 %v474, %v478
    %vm480 = vweird.f32 %v472
    %vm481 = vweird.f32 %v474
    %vm482 = vmor %vm480, %vm481
    %v483 = vsel %vm482, %v474, %v479
    %v484 = vrsqrt.pop %v473
    %v485 = vmul.f32 %v484, %v473
    %v486 = vmul.f32 %v485, %v484
    %v487 = vmul.f32 0.5, %v486
    %v488 = vsub.f32 1.5, %v487
    %v489 = vmul.f32 %v484, %v488
    %vm490 = vweird.f32 %v473
    %vm491 = vweird.f32 %v484
    %vm492 = vmor %vm490, %vm491
    %v493 = vsel %vm492, %v484, %v489
    %v494 = vmul.f32 %v460, %v483
    %v495 = vmul.f32 %v461, %v493
    %v496 = vperm.slane %v443, 0
    %v497 = vmul.f32 %v494, %v496
    %v498 = vmul.f32 %v495, %v496
    %v499 = vperm.slane %v444, 0
    %v500 = vadd.f32 %v497, %v499
    %v501 = vadd.f32 %v498, %v499
    %v502 = vld [vmem:[#allocation5 + $0xf0] sm:$0xff]
    %v503 = vld [vmem:[#allocation5 + $0xf8] sm:$0xff]
    %v504 = vld [vmem:[#allocation5 + $0x100] sm:$0xff]
    %v505 = vld [vmem:[#allocation5 + $0x108] sm:$0xff]
    %v506 = vld [vmem:[#allocation5 + $0x153] sm:$0x1]
    %v507 = vperm.slane %v506, 0
    %v509 = vsel %vm102, %v500, 0
    %v512 = vsel %vm102, %v501, 0
    %514 = vmatpush.msra.mxu0 0.0
    %515 = vmatpush.msra.mxu0 0.0
    %516 = vmatpush.msra.mxu0 0.0
    %517 = vmatpush.msra.mxu0 0.0
    %518 = vmatpush.msra.mxu0 0.0
    %519 = vmatpush.msra.mxu0 0.0
    %520 = vmatpush.msra.mxu0 0.0
    %521 = vmatpush.msra.mxu0 0.0
    %522 = vmatpush.msra.mxu0 0.0
    %523 = vmatpush.msra.mxu0 0.0
    %524 = vmatpush.msra.mxu0 0.0
    %525 = vmatpush.msra.mxu0 0.0
    %526 = vmatpush.msra.mxu0 %v505
    %527 = vmatpush.msra.mxu0 %v504
    %528 = vmatpush.msra.mxu0 %v503
    %529 = vmatpush.msra.mxu0 %v502
    %530 = vmatmul.f32.gmra.mxu0 %v509
    %v531 = vpop.f32.mrf.mxu0
    %v532 = vadd.f32 %v507, %v531
    %533 = vmatmul.f32.gmra.mxu0 %v512
    %v534 = vpop.f32.mrf.mxu0
    %v535 = vadd.f32 %v507, %v534
    %536 = vdwg.mxu0
    %v537 = vmax.f32 %v532, 0.0
    %v538 = vmax.f32 %v535, 0.0
    %v539 = vld [vmem:[#allocation5 + $0x110] sm:$0xff]
    %v540 = vld [vmem:[#allocation5 + $0x118] sm:$0xff]
    %v541 = vld [vmem:[#allocation5 + $0x120] sm:$0xff]
    %v542 = vld [vmem:[#allocation5 + $0x128] sm:$0xff]
    %v543 = vld [vmem:[#allocation5 + $0x130] sm:$0xff]
    %v544 = vld [vmem:[#allocation5 + $0x138] sm:$0xff]
    %v545 = vld [vmem:[#allocation5 + $0x140] sm:$0xff]
    %v546 = vld [vmem:[#allocation5 + $0x148] sm:$0xff]
    %v547 = vld [vmem:[#allocation5 + $0x154] sm:$0x1]
    %v548 = vperm.slane %v547, 0
    %v550 = vsel %vm273, %v537, 0
    %v553 = vsel %vm273, %v538, 0
    %555 = vmatpush.msra.mxu0 0.0
    %556 = vmatpush.msra.mxu0 0.0
    %557 = vmatpush.msra.mxu0 0.0
    %558 = vmatpush.msra.mxu0 0.0
    %559 = vmatpush.msra.mxu0 0.0
    %560 = vmatpush.msra.mxu0 0.0
    %561 = vmatpush.msra.mxu0 0.0
    %562 = vmatpush.msra.mxu0 0.0
    %563 = vmatpush.msra.mxu0 %v546
    %564 = vmatpush.msra.mxu0 %v545
    %565 = vmatpush.msra.mxu0 %v544
    %566 = vmatpush.msra.mxu0 %v543
    %567 = vmatpush.msra.mxu0 %v542
    %568 = vmatpush.msra.mxu0 %v541
    %569 = vmatpush.msra.mxu0 %v540
    %570 = vmatpush.msra.mxu0 %v539
    %571 = vmatmul.f32.gmra.mxu0 %v550
    %v572 = vpop.f32.mrf.mxu0
    %v573 = vadd.f32 %v548, %v572
    %574 = vmatmul.f32.gmra.mxu0 %v553
    %v575 = vpop.f32.mrf.mxu0
    %v576 = vadd.f32 %v548, %v575
    %577 = vdwg.mxu0
    %v578 = vadd.f32 %v573, %v500
    %v579 = vadd.f32 %v576, %v501
    %v580 = vld [vmem:[#allocation5 + $0x155] sm:$0x1]
    %v581 = vld [vmem:[#allocation5 + $0x156] sm:$0x1]
    %v582 = vsel %vm102, %v578, 0.0
    %583 = vadd.xlane.f32.xlu0 %v582
    %v584 = vpop.xlane.xlu0 %583
    %v585 = vsel %vm102, %v579, 0.0
    %586 = vadd.xlane.f32.xlu0 %v585
    %v587 = vpop.xlane.xlu0 %586
    %v588 = vmul.f32 %v584, %v457
    %v589 = vmul.f32 %v587, %v457
    %v590 = vsub.f32 %v578, %v588
    %v591 = vsub.f32 %v579, %v589
    %v592 = vmul.f32 %v590, %v590
    %v593 = vmul.f32 %v591, %v591
    %v594 = vsel %vm102, %v592, 0.0
    %595 = vadd.xlane.f32.xlu0 %v594
    %v596 = vpop.xlane.xlu0 %595
    %v597 = vsel %vm102, %v593, 0.0
    %598 = vadd.xlane.f32.xlu0 %v597
    %v599 = vpop.xlane.xlu0 %598
    %v600 = vmul.f32 %v596, %v457
    %v601 = vmul.f32 %v599, %v457
    %v602 = vadd.f32 %v600, 1e-05
    %v603 = vadd.f32 %v601, 1e-05
    %v604 = vrsqrt.pop %v602
    %v605 = vmul.f32 %v604, %v602
    %v606 = vmul.f32 %v605, %v604
    %v607 = vmul.f32 0.5, %v606
    %v608 = vsub.f32 1.5, %v607
    %v609 = vmul.f32 %v604, %v608
    %vm610 = vweird.f32 %v602
    %vm611 = vweird.f32 %v604
    %vm612 = vmor %vm610, %vm611
    %v613 = vsel %vm612, %v604, %v609
    %v614 = vrsqrt.pop %v603
    %v615 = vmul.f32 %v614, %v603
    %v616 = vmul.f32 %v615, %v614
    %v617 = vmul.f32 0.5, %v616
    %v618 = vsub.f32 1.5, %v617
    %v619 = vmul.f32 %v614, %v618
    %vm620 = vweird.f32 %v603
    %vm621 = vweird.f32 %v614
    %vm622 = vmor %vm620, %vm621
    %v623 = vsel %vm622, %v614, %v619
    %v624 = vmul.f32 %v590, %v613
    %v625 = vmul.f32 %v591, %v623
    %v626 = vperm.slane %v580, 0
    %v627 = vmul.f32 %v624, %v626
    %v628 = vmul.f32 %v625, %v626
    %v629 = vperm.slane %v581, 0
    %v630 = vadd.f32 %v627, %v629
    %v631 = vadd.f32 %v628, %v629
    %v632 = vld [vmem:[#allocation5 + $0x158] sm:$0xff]
    %v633 = vld [vmem:[#allocation5 + $0x160] sm:$0xff]
    %v634 = vld [vmem:[#allocation5 + $0x168] sm:$0xff]
    %v635 = vld [vmem:[#allocation5 + $0x170] sm:$0xff]
    %v637 = vsel %vm102, %v630, 0
    %v640 = vsel %vm102, %v631, 0
    %642 = vmatpush.msra.mxu0 0.0
    %643 = vmatpush.msra.mxu0 0.0
    %644 = vmatpush.msra.mxu0 0.0
    %645 = vmatpush.msra.mxu0 0.0
    %646 = vmatpush.msra.mxu0 0.0
    %647 = vmatpush.msra.mxu0 0.0
    %648 = vmatpush.msra.mxu0 0.0
    %649 = vmatpush.msra.mxu0 0.0
    %650 = vmatpush.msra.mxu0 0.0
    %651 = vmatpush.msra.mxu0 0.0
    %652 = vmatpush.msra.mxu0 0.0
    %653 = vmatpush.msra.mxu0 0.0
    %654 = vmatpush.msra.mxu0 %v635
    %655 = vmatpush.msra.mxu0 %v634
    %656 = vmatpush.msra.mxu0 %v633
    %657 = vmatpush.msra.mxu0 %v632
    %658 = vmatmul.f32.gmra.mxu0 %v637
    %v659 = vpop.f32.mrf.mxu0
    %v660 = vadd.f32 0.0, %v659
    %661 = vmatmul.f32.gmra.mxu0 %v640
    %v662 = vpop.f32.mrf.mxu0
    %v663 = vadd.f32 0.0, %v662
    %664 = vdwg.mxu0
    %v665 = vmul.f32 %v660, %v141
    %v666 = vmul.f32 %v663, %v143
    %v667 = vmul.f32 %v660, %v145
    %v668 = vmul.f32 %v663, %v147
    %v669 = vmul.f32 %v660, %v149
    %v670 = vmul.f32 %v663, %v151
    %v671 = vmul.f32 %v660, %v153
    %v672 = vmul.f32 %v663, %v155
    %v673 = vmul.f32 %v660, %v173
    %v674 = vmul.f32 %v663, %v175
    %v675 = vmul.f32 %v660, %v177
    %v676 = vmul.f32 %v663, %v179
    %v677 = vmul.f32 %v660, %v181
    %v678 = vmul.f32 %v663, %v183
    %v679 = vmul.f32 %v660, %v185
    %v680 = vmul.f32 %v663, %v187
    %689 = vrot.lane.b32.xlu0 %v665, 96
    %v690 = vpop.permute.xlu0 %689
    %691 = vrot.lane.b32.xlu0 %v666, 96
    %v692 = vpop.permute.xlu0 %691
    %693 = vrot.lane.b32.xlu0 %v667, 96
    %v694 = vpop.permute.xlu0 %693
    %695 = vrot.lane.b32.xlu0 %v668, 96
    %v696 = vpop.permute.xlu0 %695
    %697 = vrot.lane.b32.xlu0 %v669, 96
    %v698 = vpop.permute.xlu0 %697
    %699 = vrot.lane.b32.xlu0 %v670, 96
    %v700 = vpop.permute.xlu0 %699
    %701 = vrot.lane.b32.xlu0 %v671, 96
    %v702 = vpop.permute.xlu0 %701
    %703 = vrot.lane.b32.xlu0 %v672, 96
    %v704 = vpop.permute.xlu0 %703
    %v706 = vsel %vm102, %v660, 0
    %v709 = vsel %vm102, %v663, 0
    %v711 = vsel %vm102, %v690, 0
    %v713 = vsel %vm102, %v692, 0
    %v715 = vsel %vm102, %v694, 0
    %v717 = vsel %vm102, %v696, 0
    %v719 = vsel %vm102, %v698, 0
    %v721 = vsel %vm102, %v700, 0
    %v723 = vsel %vm102, %v702, 0
    %v725 = vsel %vm102, %v704, 0
    %727 = vmatpush.xpose.msra.mxu0 0.0
    %728 = vmatpush.xpose.msra.mxu0 0.0
    %729 = vmatpush.xpose.msra.mxu0 0.0
    %730 = vmatpush.xpose.msra.mxu0 0.0
    %731 = vmatpush.xpose.msra.mxu0 0.0
    %732 = vmatpush.xpose.msra.mxu0 0.0
    %733 = vmatpush.xpose.msra.mxu0 0.0
    %734 = vmatpush.xpose.msra.mxu0 0.0
    %735 = vmatpush.xpose.msra.mxu0 %v725
    %736 = vmatpush.xpose.msra.mxu0 %v723
    %737 = vmatpush.xpose.msra.mxu0 %v721
    %738 = vmatpush.xpose.msra.mxu0 %v719
    %739 = vmatpush.xpose.msra.mxu0 %v717
    %740 = vmatpush.xpose.msra.mxu0 %v715
    %741 = vmatpush.xpose.msra.mxu0 %v713
    %742 = vmatpush.xpose.msra.mxu0 %v711
    %743 = vmatmul.f32.gmra.mxu0 %v706
    %v744 = vpop.f32.mrf.mxu0
    %v745 = vadd.f32 %v46, %v744
    %746 = vmatmul.f32.gmra.mxu0 %v709
    %v747 = vpop.f32.mrf.mxu0
    %v748 = vadd.f32 %v47, %v747
    %749 = vdwg.mxu0
    %v750 = vsel %vm273, %v745, -inf
    %751 = vmax.xlane.f32.xlu0 %v750
    %v752 = vpop.xlane.xlu0 %751
    %v753 = vsel %vm273, %v748, -inf
    %754 = vmax.xlane.f32.xlu0 %v753
    %v755 = vpop.xlane.xlu0 %754
    %v756 = vsub.f32 %v745, %v752
    %v757 = vsub.f32 %v748, %v755
    %v758 = vmul.f32 %v756, 1.442695
    %v759 = vpow.pop %v758
    %v760 = vmul.f32 %v757, 1.442695
    %v761 = vpow.pop %v760
    %v763 = vsel %vm273, %v759, 0
    %v766 = vsel %vm273, %v761, 0
    %768 = vmatpush.msra.mxu0 0.0
    %769 = vmatpush.msra.mxu0 0.0
    %770 = vmatpush.msra.mxu0 0.0
    %771 = vmatpush.msra.mxu0 0.0
    %772 = vmatpush.msra.mxu0 0.0
    %773 = vmatpush.msra.mxu0 0.0
    %774 = vmatpush.msra.mxu0 0.0
    %775 = vmatpush.msra.mxu0 0.0
    %776 = vmatpush.msra.mxu0 %v63
    %777 = vmatpush.msra.mxu0 %v62
    %778 = vmatpush.msra.mxu0 %v61
    %779 = vmatpush.msra.mxu0 %v60
    %780 = vmatpush.msra.mxu0 %v59
    %781 = vmatpush.msra.mxu0 %v58
    %782 = vmatpush.msra.mxu0 %v57
    %783 = vmatpush.msra.mxu0 %v56
    %784 = vmatmul.f32.gmra.mxu0 %v763
    %v785 = vpop.f32.mrf.mxu0
    %v786 = vadd.f32 0.0, %v785
    %787 = vmatmul.f32.gmra.mxu0 %v766
    %v788 = vpop.f32.mrf.mxu0
    %v789 = vadd.f32 0.0, %v788
    %790 = vdwg.mxu0
    %v791 = vrcp.pop %v786
    %v792 = vmul.f32 %v786, %v791
    %v793 = vsub.f32 1.0, %v792
    %v794 = vmul.f32 %v791, %v793
    %v795 = vadd.f32 %v791, %v794
    %vm796 = vweird.f32 %v786
    %vm797 = vweird.f32 %v791
    %vm798 = vmor %vm796, %vm797
    %v799 = vsel %vm798, %v791, %v795
    %v800 = vand.u32 2147483647, %v786
    %vm801 = vcmp.eq.f32.partialorder %v800, 8.507059e+37
    %v802 = vand.u32 %v786, 2147483648
    %v803 = vor.u32 1.1754944e-38, %v802
    %v804 = vsel %vm801, %v803, %v799
    %v805 = vmul.f32 %v759, %v804
    %v806 = vrcp.pop %v789
    %v807 = vmul.f32 %v789, %v806
    %v808 = vsub.f32 1.0, %v807
    %v809 = vmul.f32 %v806, %v808
    %v810 = vadd.f32 %v806, %v809
    %vm811 = vweird.f32 %v789
    %vm812 = vweird.f32 %v806
    %vm813 = vmor %vm811, %vm812
    %v814 = vsel %vm813, %v806, %v810
    %v815 = vand.u32 2147483647, %v789
    %vm816 = vcmp.eq.f32.partialorder %v815, 8.507059e+37
    %v817 = vand.u32 %v789, 2147483648
    %v818 = vor.u32 1.1754944e-38, %v817
    %v819 = vsel %vm816, %v818, %v814
    %v820 = vmul.f32 %v761, %v819
    %829 = vrot.lane.b32.xlu0 %v673, 64
    %v830 = vpop.permute.xlu0 %829
    %831 = vrot.lane.b32.xlu0 %v674, 64
    %v832 = vpop.permute.xlu0 %831
    %833 = vrot.lane.b32.xlu0 %v675, 64
    %v834 = vpop.permute.xlu0 %833
    %835 = vrot.lane.b32.xlu0 %v676, 64
    %v836 = vpop.permute.xlu0 %835
    %837 = vrot.lane.b32.xlu0 %v677, 64
    %v838 = vpop.permute.xlu0 %837
    %839 = vrot.lane.b32.xlu0 %v678, 64
    %v840 = vpop.permute.xlu0 %839
    %841 = vrot.lane.b32.xlu0 %v679, 64
    %v842 = vpop.permute.xlu0 %841
    %843 = vrot.lane.b32.xlu0 %v680, 64
    %v844 = vpop.permute.xlu0 %843
    %v854 = vsel %vm273, %v805, 0
    %v857 = vsel %vm273, %v820, 0
    %859 = vmatpush.msra.mxu0 0.0
    %860 = vmatpush.msra.mxu0 0.0
    %861 = vmatpush.msra.mxu0 0.0
    %862 = vmatpush.msra.mxu0 0.0
    %863 = vmatpush.msra.mxu0 0.0
    %864 = vmatpush.msra.mxu0 0.0
    %865 = vmatpush.msra.mxu0 0.0
    %866 = vmatpush.msra.mxu0 0.0
    %867 = vmatpush.msra.mxu0 %v844
    %868 = vmatpush.msra.mxu0 %v842
    %869 = vmatpush.msra.mxu0 %v840
    %870 = vmatpush.msra.mxu0 %v838
    %871 = vmatpush.msra.mxu0 %v836
    %872 = vmatpush.msra.mxu0 %v834
    %873 = vmatpush.msra.mxu0 %v832
    %874 = vmatpush.msra.mxu0 %v830
    %875 = vmatmul.f32.gmra.mxu0 %v854
    %v876 = vpop.f32.mrf.mxu0
    %v877 = vadd.f32 0.0, %v876
    %878 = vmatmul.f32.gmra.mxu0 %v857
    %v879 = vpop.f32.mrf.mxu0
    %v880 = vadd.f32 0.0, %v879
    %881 = vdwg.mxu0
    %v882 = vld [vmem:[#allocation5 + $0x178] sm:$0xff]
    %v883 = vld [vmem:[#allocation5 + $0x180] sm:$0xff]
    %v884 = vld [vmem:[#allocation5 + $0x188] sm:$0xff]
    %v885 = vld [vmem:[#allocation5 + $0x190] sm:$0xff]
    %v886 = vld [vmem:[#allocation5 + $0x1f8] sm:$0x1]
    %v887 = vperm.slane %v886, 0
    %v889 = vsel %vm102, %v877, 0
    %v892 = vsel %vm102, %v880, 0
    %894 = vmatpush.msra.mxu0 0.0
    %895 = vmatpush.msra.mxu0 0.0
    %896 = vmatpush.msra.mxu0 0.0
    %897 = vmatpush.msra.mxu0 0.0
    %898 = vmatpush.msra.mxu0 0.0
    %899 = vmatpush.msra.mxu0 0.0
    %900 = vmatpush.msra.mxu0 0.0
    %901 = vmatpush.msra.mxu0 0.0
    %902 = vmatpush.msra.mxu0 0.0
    %903 = vmatpush.msra.mxu0 0.0
    %904 = vmatpush.msra.mxu0 0.0
    %905 = vmatpush.msra.mxu0 0.0
    %906 = vmatpush.msra.mxu0 %v885
    %907 = vmatpush.msra.mxu0 %v884
    %908 = vmatpush.msra.mxu0 %v883
    %909 = vmatpush.msra.mxu0 %v882
    %910 = vmatmul.f32.gmra.mxu0 %v889
    %v911 = vpop.f32.mrf.mxu0
    %v912 = vadd.f32 %v887, %v911
    %913 = vmatmul.f32.gmra.mxu0 %v892
    %v914 = vpop.f32.mrf.mxu0
    %v915 = vadd.f32 %v887, %v914
    %916 = vdwg.mxu0
    %v917 = vadd.f32 %v912, %v630
    %v918 = vadd.f32 %v915, %v631
    %v919 = vld [vmem:[#allocation5 + $0x1f9] sm:$0x1]
    %v920 = vld [vmem:[#allocation5 + $0x1fa] sm:$0x1]
    %v921 = vsel %vm102, %v917, 0.0
    %922 = vadd.xlane.f32.xlu0 %v921
    %v923 = vpop.xlane.xlu0 %922
    %v924 = vsel %vm102, %v918, 0.0
    %925 = vadd.xlane.f32.xlu0 %v924
    %v926 = vpop.xlane.xlu0 %925
    %v927 = vmul.f32 %v923, %v457
    %v928 = vmul.f32 %v926, %v457
    %v929 = vsub.f32 %v917, %v927
    %v930 = vsub.f32 %v918, %v928
    %v931 = vmul.f32 %v929, %v929
    %v932 = vmul.f32 %v930, %v930
    %v933 = vsel %vm102, %v931, 0.0
    %934 = vadd.xlane.f32.xlu0 %v933
    %v935 = vpop.xlane.xlu0 %934
    %v936 = vsel %vm102, %v932, 0.0
    %937 = vadd.xlane.f32.xlu0 %v936
    %v938 = vpop.xlane.xlu0 %937
    %v939 = vmul.f32 %v935, %v457
    %v940 = vmul.f32 %v938, %v457
    %v941 = vadd.f32 %v939, 1e-05
    %v942 = vadd.f32 %v940, 1e-05
    %v943 = vrsqrt.pop %v941
    %v944 = vmul.f32 %v943, %v941
    %v945 = vmul.f32 %v944, %v943
    %v946 = vmul.f32 0.5, %v945
    %v947 = vsub.f32 1.5, %v946
    %v948 = vmul.f32 %v943, %v947
    %vm949 = vweird.f32 %v941
    %vm950 = vweird.f32 %v943
    %vm951 = vmor %vm949, %vm950
    %v952 = vsel %vm951, %v943, %v948
    %v953 = vrsqrt.pop %v942
    %v954 = vmul.f32 %v953, %v942
    %v955 = vmul.f32 %v954, %v953
    %v956 = vmul.f32 0.5, %v955
    %v957 = vsub.f32 1.5, %v956
    %v958 = vmul.f32 %v953, %v957
    %vm959 = vweird.f32 %v942
    %vm960 = vweird.f32 %v953
    %vm961 = vmor %vm959, %vm960
    %v962 = vsel %vm961, %v953, %v958
    %v963 = vmul.f32 %v929, %v952
    %v964 = vmul.f32 %v930, %v962
    %v965 = vperm.slane %v919, 0
    %v966 = vmul.f32 %v963, %v965
    %v967 = vmul.f32 %v964, %v965
    %v968 = vperm.slane %v920, 0
    %v969 = vadd.f32 %v966, %v968
    %v970 = vadd.f32 %v967, %v968
    %v971 = vld [vmem:[#allocation5 + $0x198] sm:$0xff]
    %v972 = vld [vmem:[#allocation5 + $0x1a0] sm:$0xff]
    %v973 = vld [vmem:[#allocation5 + $0x1a8] sm:$0xff]
    %v974 = vld [vmem:[#allocation5 + $0x1b0] sm:$0xff]
    %v975 = vld [vmem:[#allocation5 + $0x1fb] sm:$0x1]
    %v976 = vperm.slane %v975, 0
    %v978 = vsel %vm102, %v969, 0
    %v981 = vsel %vm102, %v970, 0
    %983 = vmatpush.msra.mxu0 0.0
    %984 = vmatpush.msra.mxu0 0.0
    %985 = vmatpush.msra.mxu0 0.0
    %986 = vmatpush.msra.mxu0 0.0
    %987 = vmatpush.msra.mxu0 0.0
    %988 = vmatpush.msra.mxu0 0.0
    %989 = vmatpush.msra.mxu0 0.0
    %990 = vmatpush.msra.mxu0 0.0
    %991 = vmatpush.msra.mxu0 0.0
    %992 = vmatpush.msra.mxu0 0.0
    %993 = vmatpush.msra.mxu0 0.0
    %994 = vmatpush.msra.mxu0 0.0
    %995 = vmatpush.msra.mxu0 %v974
    %996 = vmatpush.msra.mxu0 %v973
    %997 = vmatpush.msra.mxu0 %v972
    %998 = vmatpush.msra.mxu0 %v971
    %999 = vmatmul.f32.gmra.mxu0 %v978
    %v1000 = vpop.f32.mrf.mxu0
    %v1001 = vadd.f32 %v976, %v1000
    %1002 = vmatmul.f32.gmra.mxu0 %v981
    %v1003 = vpop.f32.mrf.mxu0
    %v1004 = vadd.f32 %v976, %v1003
    %1005 = vdwg.mxu0
    %v1006 = vmax.f32 %v1001, 0.0
    %v1007 = vmax.f32 %v1004, 0.0
    %v1008 = vld [vmem:[#allocation5 + $0x1b8] sm:$0xff]
    %v1009 = vld [vmem:[#allocation5 + $0x1c0] sm:$0xff]
    %v1010 = vld [vmem:[#allocation5 + $0x1c8] sm:$0xff]
    %v1011 = vld [vmem:[#allocation5 + $0x1d0] sm:$0xff]
    %v1012 = vld [vmem:[#allocation5 + $0x1d8] sm:$0xff]
    %v1013 = vld [vmem:[#allocation5 + $0x1e0] sm:$0xff]
    %v1014 = vld [vmem:[#allocation5 + $0x1e8] sm:$0xff]
    %v1015 = vld [vmem:[#allocation5 + $0x1f0] sm:$0xff]
    %v1016 = vld [vmem:[#allocation5 + $0x1fc] sm:$0x1]
    %v1017 = vperm.slane %v1016, 0
    %v1019 = vsel %vm273, %v1006, 0
    %v1022 = vsel %vm273, %v1007, 0
    %1024 = vmatpush.msra.mxu0 0.0
    %1025 = vmatpush.msra.mxu0 0.0
    %1026 = vmatpush.msra.mxu0 0.0
    %1027 = vmatpush.msra.mxu0 0.0
    %1028 = vmatpush.msra.mxu0 0.0
    %1029 = vmatpush.msra.mxu0 0.0
    %1030 = vmatpush.msra.mxu0 0.0
    %1031 = vmatpush.msra.mxu0 0.0
    %1032 = vmatpush.msra.mxu0 %v1015
    %1033 = vmatpush.msra.mxu0 %v1014
    %1034 = vmatpush.msra.mxu0 %v1013
    %1035 = vmatpush.msra.mxu0 %v1012
    %1036 = vmatpush.msra.mxu0 %v1011
    %1037 = vmatpush.msra.mxu0 %v1010
    %1038 = vmatpush.msra.mxu0 %v1009
    %1039 = vmatpush.msra.mxu0 %v1008
    %1040 = vmatmul.f32.gmra.mxu0 %v1019
    %v1041 = vpop.f32.mrf.mxu0
    %v1042 = vadd.f32 %v1017, %v1041
    %1043 = vmatmul.f32.gmra.mxu0 %v1022
    %v1044 = vpop.f32.mrf.mxu0
    %v1045 = vadd.f32 %v1017, %v1044
    %1046 = vdwg.mxu0
    %v1047 = vadd.f32 %v1042, %v969
    %v1048 = vadd.f32 %v1045, %v970
    %v1049 = vld [vmem:[#allocation5 + $0x1fd] sm:$0x1]
    %v1050 = vld [vmem:[#allocation5 + $0x1fe] sm:$0x1]
    %v1051 = vsel %vm102, %v1047, 0.0
    %1052 = vadd.xlane.f32.xlu0 %v1051
    %v1053 = vpop.xlane.xlu0 %1052
    %v1054 = vsel %vm102, %v1048, 0.0
    %1055 = vadd.xlane.f32.xlu0 %v1054
    %v1056 = vpop.xlane.xlu0 %1055
    %v1057 = vmul.f32 %v1053, %v457
    %v1058 = vmul.f32 %v1056, %v457
    %v1059 = vsub.f32 %v1047, %v1057
    %v1060 = vsub.f32 %v1048, %v1058
    %v1061 = vmul.f32 %v1059, %v1059
    %v1062 = vmul.f32 %v1060, %v1060
    %v1063 = vsel %vm102, %v1061, 0.0
    %1064 = vadd.xlane.f32.xlu0 %v1063
    %v1065 = vpop.xlane.xlu0 %1064
    %v1066 = vsel %vm102, %v1062, 0.0
    %1067 = vadd.xlane.f32.xlu0 %v1066
    %v1068 = vpop.xlane.xlu0 %1067
    %v1069 = vmul.f32 %v1065, %v457
    %v1070 = vmul.f32 %v1068, %v457
    %v1071 = vadd.f32 %v1069, 1e-05
    %v1072 = vadd.f32 %v1070, 1e-05
    %v1073 = vrsqrt.pop %v1071
    %v1074 = vmul.f32 %v1073, %v1071
    %v1075 = vmul.f32 %v1074, %v1073
    %v1076 = vmul.f32 0.5, %v1075
    %v1077 = vsub.f32 1.5, %v1076
    %v1078 = vmul.f32 %v1073, %v1077
    %vm1079 = vweird.f32 %v1071
    %vm1080 = vweird.f32 %v1073
    %vm1081 = vmor %vm1079, %vm1080
    %v1082 = vsel %vm1081, %v1073, %v1078
    %v1083 = vrsqrt.pop %v1072
    %v1084 = vmul.f32 %v1083, %v1072
    %v1085 = vmul.f32 %v1084, %v1083
    %v1086 = vmul.f32 0.5, %v1085
    %v1087 = vsub.f32 1.5, %v1086
    %v1088 = vmul.f32 %v1083, %v1087
    %vm1089 = vweird.f32 %v1072
    %vm1090 = vweird.f32 %v1083
    %vm1091 = vmor %vm1089, %vm1090
    %v1092 = vsel %vm1091, %v1083, %v1088
    %v1093 = vmul.f32 %v1059, %v1082
    %v1094 = vmul.f32 %v1060, %v1092
    %v1095 = vperm.slane %v1049, 0
    %v1096 = vmul.f32 %v1093, %v1095
    %v1097 = vmul.f32 %v1094, %v1095
    %v1098 = vperm.slane %v1050, 0
    %v1099 = vadd.f32 %v1096, %v1098
    %v1100 = vadd.f32 %v1097, %v1098
    %1101 = vst.msk [vmem:[#allocation7] sm:$0xff] %vm102, %v1099
    %1102 = vst.msk [vmem:[#allocation7 + $0x8] sm:$0xff] %vm102, %v1100
    // Predicated region
    $region18: #{tpu_custom_call.1} parent=1 // pred_check
      _
    $region19: #{tpu_custom_call.1} parent=1 // pred_check_branch
      %1104 = sbr.rel (0) target = $region21
    $region20: #{tpu_custom_call.1} parent=1 // pred_region
      %1106 = vsyncadd [#allocation4], 0
      %s1107 = sshll.u32 [#allocation7], 4
      %s1108 = int_to_ptr.vmem [resolvable:$true] %s1107
      %s1109 = sshll.u32 %s2, 4
      %s1110 = int_to_ptr.hbm [resolvable:$true] %s1109
      %1115 = dma.vmem_to_hbm [thread:$0]  %s1108, 256, %s1110, [#allocation4], 128, 128, 8
    $region21: #{tpu_custom_call.1} parent=1 // pred_fallthru
      _
    // Predicated region
    $region22: #{tpu_custom_call.1} parent=1 // pred_check
      _
    $region23: #{tpu_custom_call.1} parent=1 // pred_check_branch
      %1117 = sbr.rel (0) target = $region25
    $region24: #{tpu_custom_call.1} parent=1 // pred_region
      %1119 = dma.done [#allocation4], 256
    $region25: #{tpu_custom_call.1} parent=1 // pred_fallthru
      _
    %1120 = vsyncpa [#allocation3], 1
    %1121 = vsyncpa [#allocation6], 1
    %1122 = vsyncpa [#allocation4], 1

</llo_original>
